<compile_context>
chip_gen: v7x
topology: tpu7x:2x2x1
jax: 0.10.0
libtpu: 0.0.40
codegen_flags: <defaults>
</compile_context>

<pallas_src>
import jax
import jax.numpy as jnp
from jax.experimental import pallas as pl
from jax.experimental.pallas import tpu as pltpu


def soft_q_kernel(x_ref, a_ref,
                  w1x_ref, w1a_ref, b1_ref,
                  w2_ref, b2_ref,
                  w3_ref, b3_ref,
                  q_ref):
    # Fused concat: cat([x, a], 1) @ W1  ==  x @ W1[:obs] + a @ W1[obs:]
    h1 = (jnp.dot(x_ref[...], w1x_ref[...], preferred_element_type=jnp.float32)
          + jnp.dot(a_ref[...], w1a_ref[...], preferred_element_type=jnp.float32)
          + b1_ref[...])
    h1 = jnp.maximum(h1, 0.0)

    h2 = jnp.dot(h1, w2_ref[...], preferred_element_type=jnp.float32) + b2_ref[...]
    h2 = jnp.maximum(h2, 0.0)

    q = jnp.dot(h2, w3_ref[...], preferred_element_type=jnp.float32) + b3_ref[...]
    q_ref[...] = q.astype(q_ref.dtype)


def soft_q_forward(x, a, params, tb=512):
    """x: (B, obs_dim), a: (B, act_dim).  Returns q: (B, 1) float32."""
    x = x.astype(jnp.float32)
    a = a.astype(jnp.float32)
    B, obs_dim = x.shape
    act_dim = a.shape[1]
    hidden = params["w1"].shape[1]

    # Batch tile: multiple of 8 sublanes, clamped to the (8-rounded) batch.
    tb = min(tb, max(8, ((B + 7) // 8) * 8))
    Bp = pl.cdiv(B, tb) * tb
    if Bp != B:
        pad = Bp - B
        x = jnp.pad(x, ((0, pad), (0, 0)))
        a = jnp.pad(a, ((0, pad), (0, 0)))

    # Split fc1's weight so the concat happens inside the kernel.
    w1x = params["w1"][:obs_dim, :]
    w1a = params["w1"][obs_dim:, :]

    grid = (pl.cdiv(Bp, tb),)
    resident = lambda shape: pl.BlockSpec(shape, lambda i: (0, 0))  # VMEM-resident

    q_pad = pl.pallas_call(
        soft_q_kernel,
        out_shape=jax.ShapeDtypeStruct((Bp, 1), jnp.float32),
        grid=grid,
        in_specs=[
            pl.BlockSpec((tb, obs_dim), lambda i: (i, 0)),   # x   (streamed)
            pl.BlockSpec((tb, act_dim), lambda i: (i, 0)),   # a   (streamed)
            resident((obs_dim, hidden)),                     # W1_x
            resident((act_dim, hidden)),                     # W1_a
            resident((1, hidden)),                           # b1
            resident((hidden, hidden)),                      # W2
            resident((1, hidden)),                           # b2
            resident((hidden, 1)),                           # W3
            resident((1, 1)),                                # b3
        ],
        out_specs=pl.BlockSpec((tb, 1), lambda i: (i, 0)),
        compiler_params=pltpu.CompilerParams(
            dimension_semantics=("parallel",),               # 2x on v7x (2 TCs)
        ),
    )(x, a, w1x, w1a, params["b1"], params["w2"], params["b2"],
      params["w3"], params["b3"])

    return q_pad[:B, :]


def init_params(key, obs_dim, act_dim, hidden=10):
    """PyTorch nn.Linear-style uniform init: U(-1/sqrt(fan_in), +1/sqrt(fan_in))."""
    def linear(key, fan_in, fan_out):
        kw, kb = jax.random.split(key)
        bound = 1.0 / jnp.sqrt(jnp.float32(fan_in))
        w = jax.random.uniform(kw, (fan_in, fan_out), jnp.float32, -bound, bound)
        b = jax.random.uniform(kb, (1, fan_out), jnp.float32, -bound, bound)
        return w, b

    k1, k2, k3 = jax.random.split(key, 3)
    w1, b1 = linear(k1, obs_dim + act_dim, hidden)
    w2, b2 = linear(k2, hidden, hidden)
    w3, b3 = linear(k3, hidden, 1)
    return dict(w1=w1, b1=b1, w2=w2, b2=b2, w3=w3, b3=b3)


def soft_q_forward_ref(x, a, p):
    xa = jnp.concatenate([x, a], axis=1).astype(jnp.float32)
    h1 = jnp.maximum(xa @ p["w1"] + p["b1"], 0.0)
    h2 = jnp.maximum(h1 @ p["w2"] + p["b2"], 0.0)
    return h2 @ p["w3"] + p["b3"]


if __name__ == "__main__":
    # Shapes implied by the module: hidden=10 (fixed), out=1; pick obs_dim=8,
    # act_dim=4, batch=8 for the small deterministic check.
    B, OBS, ACT, HID = 8, 8, 4, 10

    key = jax.random.PRNGKey(0)
    kx, ka, kp = jax.random.split(key, 3)
    x = jax.random.normal(kx, (B, OBS), jnp.float32)
    a = jax.random.normal(ka, (B, ACT), jnp.float32)
    params = init_params(kp, OBS, ACT, HID)

    q = soft_q_forward(x, a, params)
    jax.block_until_ready(q)
    q_ref = soft_q_forward_ref(x, a, params)
    assert q.shape == (B, 1)
    assert jnp.allclose(q, q_ref, atol=1e-5, rtol=1e-5)

    # Second check: non-tile-multiple batch exercises padding + the batch grid
    # (weights stay VMEM-resident across grid steps, batch axis is "parallel").
    B2 = 300
    kx2, ka2 = jax.random.split(jax.random.PRNGKey(1))
    x2 = jax.random.normal(kx2, (B2, OBS), jnp.float32)
    a2 = jax.random.normal(ka2, (B2, ACT), jnp.float32)
    q2 = soft_q_forward(x2, a2, params, tb=128)
    jax.block_until_ready(q2)
    q2_ref = soft_q_forward_ref(x2, a2, params)
    assert q2.shape == (B2, 1)
    assert jnp.allclose(q2, q2_ref, atol=1e-5, rtol=1e-5)

    # TODO(synk): the SAC training loop (target Q, losses, optimizer) is left
    # to host-side JAX; only the SoftQNetwork forward is kernelized.
    print("KERNEL_OK")
</pallas_src>

<mosaic_0001>
module attributes {stable_mosaic.version = 11 : i64} {
  func.func @soft_q_kernel(%arg0: i32, %arg1: memref<8x8xf32, #tpu.memory_space<vmem>>, %arg2: memref<8x4xf32, #tpu.memory_space<vmem>>, %arg3: memref<8x10xf32, #tpu.memory_space<vmem>>, %arg4: memref<4x10xf32, #tpu.memory_space<vmem>>, %arg5: memref<1x10xf32, #tpu.memory_space<vmem>>, %arg6: memref<10x10xf32, #tpu.memory_space<vmem>>, %arg7: memref<1x10xf32, #tpu.memory_space<vmem>>, %arg8: memref<10x1xf32, #tpu.memory_space<vmem>>, %arg9: memref<1x1xf32, #tpu.memory_space<vmem>>, %arg10: memref<8x1xf32, #tpu.memory_space<vmem>>) attributes {dimension_semantics = [#tpu.dimension_semantics<parallel>], iteration_bounds = array<i64: 1>, scalar_prefetch = 0 : i64, scratch_operands = 0 : i64, tpu.core_type = #tpu.core_type<tc>, window_params = [{transform_indices = @transform_0, window_bounds = array<i64: 8, 8>}, {transform_indices = @transform_1, window_bounds = array<i64: 8, 4>}, {pipeline_mode = #tpu.pipeline_mode<synchronous>, transform_indices = @transform_2, window_bounds = array<i64: 8, 10>}, {pipeline_mode = #tpu.pipeline_mode<synchronous>, transform_indices = @transform_3, window_bounds = array<i64: 4, 10>}, {pipeline_mode = #tpu.pipeline_mode<synchronous>, transform_indices = @transform_4, window_bounds = array<i64: 1, 10>}, {pipeline_mode = #tpu.pipeline_mode<synchronous>, transform_indices = @transform_5, window_bounds = array<i64: 10, 10>}, {pipeline_mode = #tpu.pipeline_mode<synchronous>, transform_indices = @transform_6, window_bounds = array<i64: 1, 10>}, {pipeline_mode = #tpu.pipeline_mode<synchronous>, transform_indices = @transform_7, window_bounds = array<i64: 10, 1>}, {pipeline_mode = #tpu.pipeline_mode<synchronous>, transform_indices = @transform_8, window_bounds = array<i64: 1, 1>}, {transform_indices = @transform_9, window_bounds = array<i64: 8, 1>}]} {
    %c0 = arith.constant 0 : index
    %c0_0 = arith.constant 0 : index
    %0 = vector.load %arg1[%c0, %c0_0] : memref<8x8xf32, #tpu.memory_space<vmem>>, vector<8x8xf32>
    %c0_1 = arith.constant 0 : index
    %c0_2 = arith.constant 0 : index
    %1 = vector.load %arg3[%c0_1, %c0_2] : memref<8x10xf32, #tpu.memory_space<vmem>>, vector<8x10xf32>
    %cst = arith.constant dense<0.000000e+00> : vector<8x10xf32>
    %2 = tpu.matmul %0, %1, %cst {dimension_numbers = #tpu.dot_dimension_numbers<[1], [0], [0], [1], [0, 0, 1, 1], [], []>} : vector<8x8xf32>, vector<8x10xf32>, vector<8x10xf32> -> vector<8x10xf32>
    %c0_3 = arith.constant 0 : index
    %c0_4 = arith.constant 0 : index
    %3 = vector.load %arg2[%c0_3, %c0_4] : memref<8x4xf32, #tpu.memory_space<vmem>>, vector<8x4xf32>
    %c0_5 = arith.constant 0 : index
    %c0_6 = arith.constant 0 : index
    %4 = vector.load %arg4[%c0_5, %c0_6] : memref<4x10xf32, #tpu.memory_space<vmem>>, vector<4x10xf32>
    %cst_7 = arith.constant dense<0.000000e+00> : vector<8x10xf32>
    %5 = tpu.matmul %3, %4, %cst_7 {dimension_numbers = #tpu.dot_dimension_numbers<[1], [0], [0], [1], [0, 0, 1, 1], [], []>} : vector<8x4xf32>, vector<4x10xf32>, vector<8x10xf32> -> vector<8x10xf32>
    %6 = arith.addf %2, %5 : vector<8x10xf32>
    %c0_8 = arith.constant 0 : index
    %c0_9 = arith.constant 0 : index
    %7 = vector.load %arg5[%c0_8, %c0_9] : memref<1x10xf32, #tpu.memory_space<vmem>>, vector<1x10xf32>
    %8 = vector.broadcast %7 : vector<1x10xf32> to vector<8x10xf32>
    %9 = arith.addf %6, %8 : vector<8x10xf32>
    %cst_10 = arith.constant 0.000000e+00 : f32
    %10 = vector.broadcast %cst_10 : f32 to vector<8x10xf32>
    %11 = arith.maximumf %9, %10 : vector<8x10xf32>
    %c0_11 = arith.constant 0 : index
    %c0_12 = arith.constant 0 : index
    %12 = vector.load %arg6[%c0_11, %c0_12] : memref<10x10xf32, #tpu.memory_space<vmem>>, vector<10x10xf32>
    %cst_13 = arith.constant dense<0.000000e+00> : vector<8x10xf32>
    %13 = tpu.matmul %11, %12, %cst_13 {dimension_numbers = #tpu.dot_dimension_numbers<[1], [0], [0], [1], [0, 0, 1, 1], [], []>} : vector<8x10xf32>, vector<10x10xf32>, vector<8x10xf32> -> vector<8x10xf32>
    %c0_14 = arith.constant 0 : index
    %c0_15 = arith.constant 0 : index
    %14 = vector.load %arg7[%c0_14, %c0_15] : memref<1x10xf32, #tpu.memory_space<vmem>>, vector<1x10xf32>
    %15 = vector.broadcast %14 : vector<1x10xf32> to vector<8x10xf32>
    %16 = arith.addf %13, %15 : vector<8x10xf32>
    %cst_16 = arith.constant 0.000000e+00 : f32
    %17 = vector.broadcast %cst_16 : f32 to vector<8x10xf32>
    %18 = arith.maximumf %16, %17 : vector<8x10xf32>
    %c0_17 = arith.constant 0 : index
    %c0_18 = arith.constant 0 : index
    %19 = vector.load %arg8[%c0_17, %c0_18] : memref<10x1xf32, #tpu.memory_space<vmem>>, vector<10x1xf32>
    %cst_19 = arith.constant dense<0.000000e+00> : vector<8x1xf32>
    %20 = tpu.matmul %18, %19, %cst_19 {dimension_numbers = #tpu.dot_dimension_numbers<[1], [0], [0], [1], [0, 0, 1, 1], [], []>} : vector<8x10xf32>, vector<10x1xf32>, vector<8x1xf32> -> vector<8x1xf32>
    %c0_20 = arith.constant 0 : index
    %c0_21 = arith.constant 0 : index
    %21 = vector.load %arg9[%c0_20, %c0_21] : memref<1x1xf32, #tpu.memory_space<vmem>>, vector<1x1xf32>
    %22 = vector.broadcast %21 : vector<1x1xf32> to vector<8x1xf32>
    %23 = arith.addf %20, %22 : vector<8x1xf32>
    %c0_22 = arith.constant 0 : index
    %c0_23 = arith.constant 0 : index
    %24 = vector.load %arg10[%c0_22, %c0_23] : memref<8x1xf32, #tpu.memory_space<vmem>>, vector<8x1xf32>
    tpu.vector_store %arg10[%c0_22, %c0_23], %23 {strides = array<i32>} : memref<8x1xf32, #tpu.memory_space<vmem>>, vector<8x1xf32>,
    return
  }
  func.func @transform_0(%arg0: i32) -> (i32, i32) {
    %c0_i32 = arith.constant 0 : i32
    %c0_i32_0 = arith.constant 0 : i32
    return %arg0, %c0_i32 : i32, i32
  }
  func.func @transform_1(%arg0: i32) -> (i32, i32) {
    %c0_i32 = arith.constant 0 : i32
    %c0_i32_0 = arith.constant 0 : i32
    return %arg0, %c0_i32 : i32, i32
  }
  func.func @transform_2(%arg0: i32) -> (i32, i32) {
    %c0_i32 = arith.constant 0 : i32
    %c0_i32_0 = arith.constant 0 : i32
    %c0_i32_1 = arith.constant 0 : i32
    return %c0_i32, %c0_i32_0 : i32, i32
  }
  func.func @transform_3(%arg0: i32) -> (i32, i32) {
    %c0_i32 = arith.constant 0 : i32
    %c0_i32_0 = arith.constant 0 : i32
    %c0_i32_1 = arith.constant 0 : i32
    return %c0_i32, %c0_i32_0 : i32, i32
  }
  func.func @transform_4(%arg0: i32) -> (i32, i32) {
    %c0_i32 = arith.constant 0 : i32
    %c0_i32_0 = arith.constant 0 : i32
    %c0_i32_1 = arith.constant 0 : i32
    return %c0_i32, %c0_i32_0 : i32, i32
  }
  func.func @transform_5(%arg0: i32) -> (i32, i32) {
    %c0_i32 = arith.constant 0 : i32
    %c0_i32_0 = arith.constant 0 : i32
    %c0_i32_1 = arith.constant 0 : i32
    return %c0_i32, %c0_i32_0 : i32, i32
  }
  func.func @transform_6(%arg0: i32) -> (i32, i32) {
    %c0_i32 = arith.constant 0 : i32
    %c0_i32_0 = arith.constant 0 : i32
    %c0_i32_1 = arith.constant 0 : i32
    return %c0_i32, %c0_i32_0 : i32, i32
  }
  func.func @transform_7(%arg0: i32) -> (i32, i32) {
    %c0_i32 = arith.constant 0 : i32
    %c0_i32_0 = arith.constant 0 : i32
    %c0_i32_1 = arith.constant 0 : i32
    return %c0_i32, %c0_i32_0 : i32, i32
  }
  func.func @transform_8(%arg0: i32) -> (i32, i32) {
    %c0_i32 = arith.constant 0 : i32
    %c0_i32_0 = arith.constant 0 : i32
    %c0_i32_1 = arith.constant 0 : i32
    return %c0_i32, %c0_i32_0 : i32, i32
  }
  func.func @transform_9(%arg0: i32) -> (i32, i32) {
    %c0_i32 = arith.constant 0 : i32
    %c0_i32_0 = arith.constant 0 : i32
    return %arg0, %c0_i32 : i32, i32
  }
}

</mosaic_0001>

<llo_original>
// kernel: tpu_custom_call.1
$region0: #{tpu_custom_call.1}
  #allocation0 [shape = 'u32[]', space=smem, size = 0x4, offset = 0x4, fixed_abs, tag = 'smem constant byte address 0x4 - core index']
  #allocation1 [shape = 'u32[144,128]{1,0:T(1,128)}', space=vmem, size = 0x12000, scoped, tag = 'internal scratch']
  #allocation2 [shape = 'f32[1,1]{1,0:T(1,128)S(1)}', space=vmem, size = 0x200, scoped, tag = 'scoped memory for tpu_custom_call.1']
  %s0 = inlined_call_operand.vmem [shape: f32[8,8], index: 0, kind: input, shape index: {}]
  %s1 = inlined_call_operand.vmem [shape: f32[8,4], index: 1, kind: input, shape index: {}]
  %s2 = inlined_call_operand.vmem [shape: f32[8,10], index: 2, kind: input, shape index: {}]
  %s3 = inlined_call_operand.vmem [shape: f32[4,10], index: 3, kind: input, shape index: {}]
  %s4 = inlined_call_operand.vmem [shape: f32[1,10], index: 4, kind: input, shape index: {}]
  %s5 = inlined_call_operand.vmem [shape: f32[10,10], index: 5, kind: input, shape index: {}]
  %s6 = inlined_call_operand.vmem [shape: f32[1,10], index: 6, kind: input, shape index: {}]
  %s7 = inlined_call_operand.vmem [shape: f32[10,1], index: 7, kind: input, shape index: {}]
  %s8 = inlined_call_operand.<no memory space> [shape: f32[1,1], index: 8, kind: input, shape index: {}]
  %s9 = inlined_call_operand.vmem [shape: f32[8,1], index: 9, kind: output, shape index: {}]
  %s10 = sld [smem:[#allocation0]]
  $region46: #{tpu_custom_call.1} parent=0
    _
  %s12 = ssub.s32 1, %s10
  %s13 = scalar_select 0, %s12, %s10
  %v14 = vstv %s8
  %15 = vst [vmem:[#allocation2] sm:$0x1] %v14
  // Predicated region
  $region2: #{tpu_custom_call.1} parent=0 // pred_check
    _
  $region3: #{tpu_custom_call.1} parent=0 // pred_check_branch
    %17 = sbr.rel (0) target = $region5
  $region4: #{tpu_custom_call.1} parent=0 // pred_region
    _
  $region5: #{tpu_custom_call.1} parent=0 // pred_fallthru
    _
  // Predicated region
  $region6: #{tpu_custom_call.1} parent=0 // pred_check
    _
  $region7: #{tpu_custom_call.1} parent=0 // pred_check_branch
    %19 = sbr.rel (0) target = $region9
  $region8: #{tpu_custom_call.1} parent=0 // pred_region
    _
  $region9: #{tpu_custom_call.1} parent=0 // pred_fallthru
    _
  // Predicated region
  $region10: #{tpu_custom_call.1} parent=0 // pred_check
    _
  $region11: #{tpu_custom_call.1} parent=0 // pred_check_branch
    %21 = sbr.rel (0) target = $region13
  $region12: #{tpu_custom_call.1} parent=0 // pred_region
    _
  $region13: #{tpu_custom_call.1} parent=0 // pred_fallthru
    _
  // Predicated region
  $region14: #{tpu_custom_call.1} parent=0 // pred_check
    _
  $region15: #{tpu_custom_call.1} parent=0 // pred_check_branch
    %23 = sbr.rel (0) target = $region17
  $region16: #{tpu_custom_call.1} parent=0 // pred_region
    _
  $region17: #{tpu_custom_call.1} parent=0 // pred_fallthru
    _
  // Predicated region
  $region18: #{tpu_custom_call.1} parent=0 // pred_check
    _
  $region19: #{tpu_custom_call.1} parent=0 // pred_check_branch
    %25 = sbr.rel (0) target = $region21
  $region20: #{tpu_custom_call.1} parent=0 // pred_region
    _
  $region21: #{tpu_custom_call.1} parent=0 // pred_fallthru
    _
  // Predicated region
  $region22: #{tpu_custom_call.1} parent=0 // pred_check
    _
  $region23: #{tpu_custom_call.1} parent=0 // pred_check_branch
    %27 = sbr.rel (0) target = $region25
  $region24: #{tpu_custom_call.1} parent=0 // pred_region
    _
  $region25: #{tpu_custom_call.1} parent=0 // pred_fallthru
    _
  // Predicated region
  $region26: #{tpu_custom_call.1} parent=0 // pred_check
    _
  $region27: #{tpu_custom_call.1} parent=0 // pred_check_branch
    %29 = sbr.rel (0) target = $region29
  $region28: #{tpu_custom_call.1} parent=0 // pred_region
    _
  $region29: #{tpu_custom_call.1} parent=0 // pred_fallthru
    _
  // Predicated region
  $region30: #{tpu_custom_call.1} parent=0 // pred_check
    _
  $region31: #{tpu_custom_call.1} parent=0 // pred_check_branch
    %31 = sbr.rel (0) target = $region33
  $region32: #{tpu_custom_call.1} parent=0 // pred_region
    _
  $region33: #{tpu_custom_call.1} parent=0 // pred_fallthru
    _
  // Predicated region
  $region34: #{tpu_custom_call.1} parent=0 // pred_check
    _
  $region35: #{tpu_custom_call.1} parent=0 // pred_check_branch
    %33 = sbr.rel (0) target = $region37
  $region36: #{tpu_custom_call.1} parent=0 // pred_region
    _
  $region37: #{tpu_custom_call.1} parent=0 // pred_fallthru
    _
  %v34 = vld [vmem:[%s0] sm:$0xff]
  %v35 = vld [vmem:[%s2] sm:$0xff]
  %v36 = vld [vmem:[%s1] sm:$0xff]
  %v37 = vld [vmem:[%s3] sm:$0xf]
  %vm38 = vcmask 31744
  %v40 = vsel %vm38, %v36, 0
  %vm42 = vcmask 1043456
  %v44 = vsel %vm42, %v37, 0
  %46 = vmatprep.subr.mxu0 0.0
  %47 = vmatpush1.msra.mxu0 %v44
  %48 = vmatprep.subr.mxu0 0.0
  %49 = vmatpush1.msra.mxu0 0.0
  %50 = vmatprep.subr.mxu0 0.0
  %51 = vmatpush1.msra.mxu0 0.0
  %52 = vmatprep.subr.mxu0 0.0
  %53 = vmatpush1.msra.mxu0 0.0
  %54 = vmatprep.subr.mxu0 0.0
  %55 = vmatpush1.msra.mxu0 0.0
  %56 = vmatprep.subr.mxu0 0.0
  %57 = vmatpush1.msra.mxu0 0.0
  %58 = vmatprep.subr.mxu0 0.0
  %59 = vmatpush1.msra.mxu0 0.0
  %60 = vmatprep.subr.mxu0 0.0
  %61 = vmatpush1.msra.mxu0 0.0
  %62 = vmatprep.subr.mxu0 0.0
  %63 = vmatpush1.msra.mxu0 0.0
  %64 = vmatprep.subr.mxu0 0.0
  %65 = vmatpush1.msra.mxu0 0.0
  %66 = vmatprep.subr.mxu0 0.0
  %67 = vmatpush1.msra.mxu0 0.0
  %68 = vmatprep.subr.mxu0 0.0
  %69 = vmatpush1.msra.mxu0 0.0
  %70 = vmatprep.subr.mxu0 0.0
  %71 = vmatpush1.msra.mxu0 0.0
  %72 = vmatprep.subr.mxu0 0.0
  %73 = vmatpush1.msra.mxu0 0.0
  %74 = vmatprep.subr.mxu0 0.0
  %75 = vmatpush1.msra.mxu0 0.0
  %76 = vmatprep.subr.mxu0 0.0
  %77 = vmatpush1.msra.mxu0 0.0
  %78 = vmatprep.subr.mxu0 0.0
  %79 = vmatpush1.msra.mxu0 0.0
  %80 = vmatprep.subr.mxu0 0.0
  %81 = vmatpush1.msra.mxu0 0.0
  %82 = vmatprep.subr.mxu0 0.0
  %83 = vmatpush1.msra.mxu0 0.0
  %84 = vmatprep.subr.mxu0 0.0
  %85 = vmatpush1.msra.mxu0 0.0
  %86 = vmatprep.subr.mxu0 0.0
  %87 = vmatpush1.msra.mxu0 0.0
  %88 = vmatprep.subr.mxu0 0.0
  %89 = vmatpush1.msra.mxu0 0.0
  %90 = vmatprep.subr.mxu0 0.0
  %91 = vmatpush1.msra.mxu0 0.0
  %92 = vmatprep.subr.mxu0 0.0
  %93 = vmatpush1.msra.mxu0 0.0
  %94 = vmatprep.subr.mxu0 0.0
  %95 = vmatpush1.msra.mxu0 0.0
  %96 = vmatprep.subr.mxu0 0.0
  %97 = vmatpush1.msra.mxu0 0.0
  %98 = vmatprep.subr.mxu0 0.0
  %99 = vmatpush1.msra.mxu0 0.0
  %100 = vmatprep.subr.mxu0 0.0
  %101 = vmatpush1.msra.mxu0 0.0
  %102 = vmatprep.subr.mxu0 0.0
  %103 = vmatpush1.msra.mxu0 0.0
  %104 = vmatprep.subr.mxu0 0.0
  %105 = vmatpush1.msra.mxu0 0.0
  %106 = vmatprep.subr.mxu0 0.0
  %107 = vmatpush1.msra.mxu0 0.0
  %108 = vmatprep.subr.mxu0 0.0
  %109 = vmatpush1.msra.mxu0 0.0
  %110 = vmatprep.mubr.f32.mxu0 0.0
  %111 = vmatmul.mubr.f32.gmra.mrb[0].mxu0 %v40
  %v112 = vpop.f32.mrb[0].mxu0
  %v113 = vadd.f32 0.0, %v112
  %v114 = vpop.f32.mrb[0].mxu0
  %115 = vdwg.mxu0
  %vm116 = vcmask 64512
  %v118 = vsel %vm116, %v34, 0
  %120 = vmatprep.subr.mxu0 0.0
  %121 = vmatpush1.msra.mxu0 %v35
  %122 = vmatprep.subr.mxu0 0.0
  %123 = vmatpush1.msra.mxu0 0.0
  %124 = vmatprep.subr.mxu0 0.0
  %125 = vmatpush1.msra.mxu0 0.0
  %126 = vmatprep.subr.mxu0 0.0
  %127 = vmatpush1.msra.mxu0 0.0
  %128 = vmatprep.subr.mxu0 0.0
  %129 = vmatpush1.msra.mxu0 0.0
  %130 = vmatprep.subr.mxu0 0.0
  %131 = vmatpush1.msra.mxu0 0.0
  %132 = vmatprep.subr.mxu0 0.0
  %133 = vmatpush1.msra.mxu0 0.0
  %134 = vmatprep.subr.mxu0 0.0
  %135 = vmatpush1.msra.mxu0 0.0
  %136 = vmatprep.subr.mxu0 0.0
  %137 = vmatpush1.msra.mxu0 0.0
  %138 = vmatprep.subr.mxu0 0.0
  %139 = vmatpush1.msra.mxu0 0.0
  %140 = vmatprep.subr.mxu0 0.0
  %141 = vmatpush1.msra.mxu0 0.0
  %142 = vmatprep.subr.mxu0 0.0
  %143 = vmatpush1.msra.mxu0 0.0
  %144 = vmatprep.subr.mxu0 0.0
  %145 = vmatpush1.msra.mxu0 0.0
  %146 = vmatprep.subr.mxu0 0.0
  %147 = vmatpush1.msra.mxu0 0.0
  %148 = vmatprep.subr.mxu0 0.0
  %149 = vmatpush1.msra.mxu0 0.0
  %150 = vmatprep.subr.mxu0 0.0
  %151 = vmatpush1.msra.mxu0 0.0
  %152 = vmatprep.subr.mxu0 0.0
  %153 = vmatpush1.msra.mxu0 0.0
  %154 = vmatprep.subr.mxu0 0.0
  %155 = vmatpush1.msra.mxu0 0.0
  %156 = vmatprep.subr.mxu0 0.0
  %157 = vmatpush1.msra.mxu0 0.0
  %158 = vmatprep.subr.mxu0 0.0
  %159 = vmatpush1.msra.mxu0 0.0
  %160 = vmatprep.subr.mxu0 0.0
  %161 = vmatpush1.msra.mxu0 0.0
  %162 = vmatprep.subr.mxu0 0.0
  %163 = vmatpush1.msra.mxu0 0.0
  %164 = vmatprep.subr.mxu0 0.0
  %165 = vmatpush1.msra.mxu0 0.0
  %166 = vmatprep.subr.mxu0 0.0
  %167 = vmatpush1.msra.mxu0 0.0
  %168 = vmatprep.subr.mxu0 0.0
  %169 = vmatpush1.msra.mxu0 0.0
  %170 = vmatprep.subr.mxu0 0.0
  %171 = vmatpush1.msra.mxu0 0.0
  %172 = vmatprep.subr.mxu0 0.0
  %173 = vmatpush1.msra.mxu0 0.0
  %174 = vmatprep.subr.mxu0 0.0
  %175 = vmatpush1.msra.mxu0 0.0
  %176 = vmatprep.subr.mxu0 0.0
  %177 = vmatpush1.msra.mxu0 0.0
  %178 = vmatprep.subr.mxu0 0.0
  %179 = vmatpush1.msra.mxu0 0.0
  %180 = vmatprep.subr.mxu0 0.0
  %181 = vmatpush1.msra.mxu0 0.0
  %182 = vmatprep.subr.mxu0 0.0
  %183 = vmatpush1.msra.mxu0 0.0
  %184 = vmatprep.mubr.f32.mxu0 0.0
  %185 = vmatmul.mubr.f32.gmra.mrb[0].mxu0 %v118
  %v186 = vpop.f32.mrb[0].mxu0
  %v187 = vadd.f32 %v113, %v186
  %v188 = vpop.f32.mrb[0].mxu0
  %189 = vdwg.mxu0
  %v190 = vld [vmem:[%s4] sm:$0x1]
  %v192 = vlaneseq
  %v193 = vshrl.u32 %v192, 7
  %v194 = vsub.s32 0, %v193
  %v195 = vrot.slane %v190, %v194
  %v197 = vadd.f32 %v187, %v195
  %v198 = vmax.f32 %v197, 0.0
  %v199 = vld [vmem:[%s5] sm:$0xff]
  %v200 = vld [vmem:[%s5 + $0x8] sm:$0x3]
  %v201 = vld [vmem:[%s6] sm:$0x1]
  %v203 = vlaneseq
  %v204 = vshrl.u32 %v203, 7
  %v205 = vsub.s32 0, %v204
  %v206 = vrot.slane %v201, %v205
  %vm208 = vcmask 80896
  %v210 = vsel %vm208, %v198, 0
  %vm212 = vcmask 1041408
  %v214 = vsel %vm212, %v200, 0
  %216 = vmatprep.subr.mxu0 0.0
  %217 = vmatpush1.msra.mxu0 %v199
  %218 = vmatprep.subr.mxu0 0.0
  %219 = vmatpush1.msra.mxu0 %v214
  %220 = vmatprep.subr.mxu0 0.0
  %221 = vmatpush1.msra.mxu0 0.0
  %222 = vmatprep.subr.mxu0 0.0
  %223 = vmatpush1.msra.mxu0 0.0
  %224 = vmatprep.subr.mxu0 0.0
  %225 = vmatpush1.msra.mxu0 0.0
  %226 = vmatprep.subr.mxu0 0.0
  %227 = vmatpush1.msra.mxu0 0.0
  %228 = vmatprep.subr.mxu0 0.0
  %229 = vmatpush1.msra.mxu0 0.0
  %230 = vmatprep.subr.mxu0 0.0
  %231 = vmatpush1.msra.mxu0 0.0
  %232 = vmatprep.subr.mxu0 0.0
  %233 = vmatpush1.msra.mxu0 0.0
  %234 = vmatprep.subr.mxu0 0.0
  %235 = vmatpush1.msra.mxu0 0.0
  %236 = vmatprep.subr.mxu0 0.0
  %237 = vmatpush1.msra.mxu0 0.0
  %238 = vmatprep.subr.mxu0 0.0
  %239 = vmatpush1.msra.mxu0 0.0
  %240 = vmatprep.subr.mxu0 0.0
  %241 = vmatpush1.msra.mxu0 0.0
  %242 = vmatprep.subr.mxu0 0.0
  %243 = vmatpush1.msra.mxu0 0.0
  %244 = vmatprep.subr.mxu0 0.0
  %245 = vmatpush1.msra.mxu0 0.0
  %246 = vmatprep.subr.mxu0 0.0
  %247 = vmatpush1.msra.mxu0 0.0
  %248 = vmatprep.subr.mxu0 0.0
  %249 = vmatpush1.msra.mxu0 0.0
  %250 = vmatprep.subr.mxu0 0.0
  %251 = vmatpush1.msra.mxu0 0.0
  %252 = vmatprep.subr.mxu0 0.0
  %253 = vmatpush1.msra.mxu0 0.0
  %254 = vmatprep.subr.mxu0 0.0
  %255 = vmatpush1.msra.mxu0 0.0
  %256 = vmatprep.subr.mxu0 0.0
  %257 = vmatpush1.msra.mxu0 0.0
  %258 = vmatprep.subr.mxu0 0.0
  %259 = vmatpush1.msra.mxu0 0.0
  %260 = vmatprep.subr.mxu0 0.0
  %261 = vmatpush1.msra.mxu0 0.0
  %262 = vmatprep.subr.mxu0 0.0
  %263 = vmatpush1.msra.mxu0 0.0
  %264 = vmatprep.subr.mxu0 0.0
  %265 = vmatpush1.msra.mxu0 0.0
  %266 = vmatprep.subr.mxu0 0.0
  %267 = vmatpush1.msra.mxu0 0.0
  %268 = vmatprep.subr.mxu0 0.0
  %269 = vmatpush1.msra.mxu0 0.0
  %270 = vmatprep.subr.mxu0 0.0
  %271 = vmatpush1.msra.mxu0 0.0
  %272 = vmatprep.subr.mxu0 0.0
  %273 = vmatpush1.msra.mxu0 0.0
  %274 = vmatprep.subr.mxu0 0.0
  %275 = vmatpush1.msra.mxu0 0.0
  %276 = vmatprep.subr.mxu0 0.0
  %277 = vmatpush1.msra.mxu0 0.0
  %278 = vmatprep.subr.mxu0 0.0
  %279 = vmatpush1.msra.mxu0 0.0
  %280 = vmatprep.mubr.f32.mxu0 0.0
  %281 = vmatmul.mubr.f32.gmra.mrb[0].mxu0 %v210
  %v282 = vpop.f32.mrb[0].mxu0
  %v283 = vadd.f32 %v206, %v282
  %v284 = vpop.f32.mrb[0].mxu0
  %285 = vdwg.mxu0
  %v286 = vmax.f32 %v283, 0.0
  %v287 = vld [vmem:[%s7] sm:$0xff]
  %v288 = vld [vmem:[%s7 + $0x8] sm:$0x3]
  %v289 = vld [vmem:[#allocation2] sm:$0x1]
  %v291 = vlaneseq
  %v292 = vshrl.u32 %v291, 7
  %v293 = vsub.s32 0, %v292
  %v294 = vrot.slane %v289, %v293
  %v297 = vsel %vm208, %v286, 0
  %v300 = vsel %vm212, %v288, 0
  %302 = vmatprep.subr.mxu0 0.0
  %303 = vmatpush1.msra.mxu0 %v287
  %304 = vmatprep.subr.mxu0 0.0
  %305 = vmatpush1.msra.mxu0 %v300
  %306 = vmatprep.subr.mxu0 0.0
  %307 = vmatpush1.msra.mxu0 0.0
  %308 = vmatprep.subr.mxu0 0.0
  %309 = vmatpush1.msra.mxu0 0.0
  %310 = vmatprep.subr.mxu0 0.0
  %311 = vmatpush1.msra.mxu0 0.0
  %312 = vmatprep.subr.mxu0 0.0
  %313 = vmatpush1.msra.mxu0 0.0
  %314 = vmatprep.subr.mxu0 0.0
  %315 = vmatpush1.msra.mxu0 0.0
  %316 = vmatprep.subr.mxu0 0.0
  %317 = vmatpush1.msra.mxu0 0.0
  %318 = vmatprep.subr.mxu0 0.0
  %319 = vmatpush1.msra.mxu0 0.0
  %320 = vmatprep.subr.mxu0 0.0
  %321 = vmatpush1.msra.mxu0 0.0
  %322 = vmatprep.subr.mxu0 0.0
  %323 = vmatpush1.msra.mxu0 0.0
  %324 = vmatprep.subr.mxu0 0.0
  %325 = vmatpush1.msra.mxu0 0.0
  %326 = vmatprep.subr.mxu0 0.0
  %327 = vmatpush1.msra.mxu0 0.0
  %328 = vmatprep.subr.mxu0 0.0
  %329 = vmatpush1.msra.mxu0 0.0
  %330 = vmatprep.subr.mxu0 0.0
  %331 = vmatpush1.msra.mxu0 0.0
  %332 = vmatprep.subr.mxu0 0.0
  %333 = vmatpush1.msra.mxu0 0.0
  %334 = vmatprep.subr.mxu0 0.0
  %335 = vmatpush1.msra.mxu0 0.0
  %336 = vmatprep.subr.mxu0 0.0
  %337 = vmatpush1.msra.mxu0 0.0
  %338 = vmatprep.subr.mxu0 0.0
  %339 = vmatpush1.msra.mxu0 0.0
  %340 = vmatprep.subr.mxu0 0.0
  %341 = vmatpush1.msra.mxu0 0.0
  %342 = vmatprep.subr.mxu0 0.0
  %343 = vmatpush1.msra.mxu0 0.0
  %344 = vmatprep.subr.mxu0 0.0
  %345 = vmatpush1.msra.mxu0 0.0
  %346 = vmatprep.subr.mxu0 0.0
  %347 = vmatpush1.msra.mxu0 0.0
  %348 = vmatprep.subr.mxu0 0.0
  %349 = vmatpush1.msra.mxu0 0.0
  %350 = vmatprep.subr.mxu0 0.0
  %351 = vmatpush1.msra.mxu0 0.0
  %352 = vmatprep.subr.mxu0 0.0
  %353 = vmatpush1.msra.mxu0 0.0
  %354 = vmatprep.subr.mxu0 0.0
  %355 = vmatpush1.msra.mxu0 0.0
  %356 = vmatprep.subr.mxu0 0.0
  %357 = vmatpush1.msra.mxu0 0.0
  %358 = vmatprep.subr.mxu0 0.0
  %359 = vmatpush1.msra.mxu0 0.0
  %360 = vmatprep.subr.mxu0 0.0
  %361 = vmatpush1.msra.mxu0 0.0
  %362 = vmatprep.subr.mxu0 0.0
  %363 = vmatpush1.msra.mxu0 0.0
  %364 = vmatprep.subr.mxu0 0.0
  %365 = vmatpush1.msra.mxu0 0.0
  %366 = vmatprep.mubr.f32.mxu0 0.0
  %367 = vmatmul.mubr.f32.gmra.mrb[0].mxu0 %v297
  %v368 = vpop.f32.mrb[0].mxu0
  %v369 = vadd.f32 %v294, %v368
  %v370 = vpop.f32.mrb[0].mxu0
  %371 = vdwg.mxu0
  %vm372 = vcmask 7168
  %373 = vst.msk [vmem:[%s9] sm:$0xff] %vm372, %v369
  // Predicated region
  $region38: #{tpu_custom_call.1} parent=0 // pred_check
    _
  $region39: #{tpu_custom_call.1} parent=0 // pred_check_branch
    %375 = sbr.rel (0) target = $region41
  $region40: #{tpu_custom_call.1} parent=0 // pred_region
    _
  $region41: #{tpu_custom_call.1} parent=0 // pred_fallthru
    _
  // Predicated region
  $region42: #{tpu_custom_call.1} parent=0 // pred_check
    _
  $region43: #{tpu_custom_call.1} parent=0 // pred_check_branch
    %377 = sbr.rel (0) target = $region45
  $region44: #{tpu_custom_call.1} parent=0 // pred_region
    _
  $region45: #{tpu_custom_call.1} parent=0 // pred_fallthru
    _

</llo_original>
